<compile_context>
chip_gen: v6e
topology: v6e:2x2x1
jax: 0.10.0
libtpu: 0.0.40
codegen_flags: <defaults>
</compile_context>

<pallas_src>
import jax
import jax.numpy as jnp
from jax import lax
from jax.experimental import pallas as pl
from jax.experimental.pallas import tpu as pltpu

LN_EPS = 1e-5


def _softplus(x):
    # numerically stable softplus, matches torch.nn.Softplus semantics
    return jnp.maximum(x, 0.0) + jnp.log1p(jnp.exp(-jnp.abs(x)))


def _esp_kernel(s_ref, side_ref, gw_ref, out_ref):
    # s_ref    (TB, N, H)  hidden features
    # side_ref (TB, 8, N)  sublane rows: [px, py, pz, mass, atom_ref+sum(beta*w), valid, 0, 0]
    # gw_ref   (1, H)      gamma * linear_weight
    # out_ref  (1, TB)     per-molecule results, lane-dense
    x = s_ref[...]                                        # (TB, N, H)
    inv_h = 1.0 / x.shape[-1]

    # LayerNorm statistics over the feature axis (centered form for stability)
    mu = jnp.sum(x, axis=-1, keepdims=True) * inv_h       # (TB, N, 1)
    xc = x - mu
    var = jnp.sum(xc * xc, axis=-1, keepdims=True) * inv_h
    rstd = lax.rsqrt(var + LN_EPS)                        # (TB, N, 1)

    # fused LayerNorm-affine + Linear(H -> 1, bias=False):
    #   (xhat*gamma + beta) @ w.T == rstd * sum(xc * (gamma*w)) + sum(beta*w)
    # rstd is applied per-atom (scalar) instead of per-element; sum(beta*w) was
    # folded into the atom_ref side channel by the wrapper.
    dot = jnp.sum(xc * gw_ref[...], axis=-1, keepdims=True)   # (TB, N, 1)
    lin = (rstd * dot)[..., 0]                                 # (TB, N)

    side = side_ref[...]                                  # (TB, 8, N)
    px, py, pz = side[:, 0, :], side[:, 1, :], side[:, 2, :]
    mass = side[:, 3, :]
    aref = side[:, 4, :]
    valid = side[:, 5, :]

    q = _softplus(lin + aref) * valid                     # (TB, N), padded atoms -> 0

    # per-molecule center of mass (guard only fires on zero-padded molecules)
    msum = jnp.sum(mass, axis=-1, keepdims=True)          # (TB, 1)
    inv_m = 1.0 / jnp.maximum(msum, 1e-12)
    cx = jnp.sum(mass * px, axis=-1, keepdims=True) * inv_m
    cy = jnp.sum(mass * py, axis=-1, keepdims=True) * inv_m
    cz = jnp.sum(mass * pz, axis=-1, keepdims=True) * inv_m

    dx, dy, dz = px - cx, py - cy, pz - cz
    d2 = dx * dx + dy * dy + dz * dz                      # (TB, N)

    r = jnp.sum(q * d2, axis=-1)                          # (TB,)
    out_ref[...] = r.reshape(out_ref.shape)               # single lane-dense store


def electronic_spatial_extent(z, s, pos, params, tb=None, target_tile_bytes=4 << 20):
    B, N, H = s.shape
    gamma = params["ln_gamma"].astype(jnp.float32).reshape(H)
    beta = params["ln_beta"].astype(jnp.float32).reshape(H)
    w = params["lin_w"].astype(jnp.float32).reshape(H)     # nn.Linear weight (1, H)

    gw = (gamma * w).reshape(1, H)                         # fused LN-affine * linear weight
    bw = jnp.sum(beta * w)                                 # folded into atom_ref channel

    # glue: tiny embedding-table gathers + side-channel packing in plain JAX
    mass = params["atomic_mass"][z].astype(jnp.float32)               # (B, N)
    aref = params["atom_ref"][z].astype(jnp.float32)[..., 0] + bw     # (B, N)
    valid = (z != 0).astype(jnp.float32)                              # (B, N)
    zero = jnp.zeros_like(mass)
    side = jnp.stack([pos[..., 0], pos[..., 1], pos[..., 2],
                      mass, aref, valid, zero, zero], axis=1)         # (B, 8, N)

    # auto tile size: ~target_tile_bytes of streamed input per grid step, then
    # rebalance across steps so batch padding stays below 8 molecules per step.
    bytes_per_mol = (N * H + 8 * N) * 4
    if tb is None:
        tb = max(1, target_tile_bytes // bytes_per_mol)
    TB = max(1, min(int(tb), B))
    NB = pl.cdiv(B, TB)
    TB = -(-B // NB)                  # ceil(B / NB): balance work across steps
    TB = -(-TB // 8) * 8              # round up to a sublane multiple
    Bp = NB * TB
    if Bp != B:
        s = jnp.pad(s, ((0, Bp - B), (0, 0), (0, 0)))
        side = jnp.pad(side, ((0, Bp - B), (0, 0), (0, 0)))

    cost = pl.CostEstimate(
        flops=int(Bp * N * (4 * H + 40)),
        transcendentals=int(Bp * N * 3),
        bytes_accessed=int(Bp * N * H * 4 + Bp * 8 * N * 4 + H * 4 + Bp * 4),
    )

    out = pl.pallas_call(
        _esp_kernel,
        out_shape=jax.ShapeDtypeStruct((NB, 1, TB), jnp.float32),
        grid=(NB,),
        in_specs=[
            pl.BlockSpec((TB, N, H), lambda b: (b, 0, 0)),   # s (batch-tiled only)
            pl.BlockSpec((TB, 8, N), lambda b: (b, 0, 0)),   # packed per-atom side channels
            pl.BlockSpec((1, H), lambda b: (0, 0)),          # gamma * w (constant)
        ],
        out_specs=pl.BlockSpec((None, 1, TB), lambda b: (b, 0, 0)),
        compiler_params=pltpu.CompilerParams(dimension_semantics=("parallel",)),
        cost_estimate=cost,
    )(s, side, gw)
    return out.reshape(Bp)[:B].reshape(B, 1)


def reference(z, s, pos, params):
    """Pure-JAX reference mirroring the PyTorch forward."""
    gamma = params["ln_gamma"]
    beta = params["ln_beta"]
    w = params["lin_w"]                              # (1, H)

    mu = jnp.mean(s, axis=-1, keepdims=True)
    var = jnp.mean((s - mu) ** 2, axis=-1, keepdims=True)
    y = (s - mu) / jnp.sqrt(var + LN_EPS) * gamma + beta
    lin = y @ w.T                                    # (B, N, 1)
    q = _softplus(lin + params["atom_ref"][z])
    q = jnp.where((z == 0)[..., None], 0.0, q)
    mass = params["atomic_mass"][z][..., None]
    c = jnp.sum(mass * pos, axis=1, keepdims=True) / jnp.sum(mass, axis=1, keepdims=True)
    d2 = jnp.sum((pos - c) ** 2, axis=-1)            # (B, N)
    return jnp.sum(q[..., 0] * d2, axis=1, keepdims=True)


if __name__ == "__main__":
    B, N, H, MAX_Z = 2, 8, 32, 10

    key = jax.random.PRNGKey(0)
    kz, ks, kp, kg, kb, kw, ke = jax.random.split(key, 7)

    # inputs (last two atoms per molecule are padding: z == 0)
    z = jax.random.randint(kz, (B, N), 1, MAX_Z, dtype=jnp.int32)
    z = z.at[:, -2:].set(0)
    s = jax.random.normal(ks, (B, N, H), jnp.float32)
    pos = jax.random.normal(kp, (B, N, 3), jnp.float32)

    # deterministic synthetic parameters
    # TODO(synk): atomic_mass is a synthetic stand-in for ase.data.atomic_masses.
    atomic_mass = (jnp.arange(MAX_Z, dtype=jnp.float32) * 2.0 + 1.0).at[0].set(0.0)
    atom_ref_w = jax.random.normal(ke, (MAX_Z, 1), jnp.float32).at[0].set(0.0)  # padding_idx=0
    params = {
        "ln_gamma": 1.0 + 0.1 * jax.random.normal(kg, (H,), jnp.float32),
        "ln_beta": 0.1 * jax.random.normal(kb, (H,), jnp.float32),
        "lin_w": jax.random.normal(kw, (1, H), jnp.float32) / jnp.sqrt(H),
        "atom_ref": atom_ref_w,
        "atomic_mass": atomic_mass,
    }

    out = jax.block_until_ready(electronic_spatial_extent(z, s, pos, params))
    ref = jax.block_until_ready(reference(z, s, pos, params))

    assert out.shape == (B, 1), out.shape
    assert jnp.allclose(out, ref, rtol=1e-3, atol=1e-3), (out, ref)
    print("KERNEL_OK")
</pallas_src>

<mosaic_0001>
module attributes {stable_mosaic.version = 11 : i64} {
  func.func @_esp_kernel(%arg0: i32, %arg1: memref<8x8x32xf32, #tpu.memory_space<vmem>>, %arg2: memref<8x8x8xf32, #tpu.memory_space<vmem>>, %arg3: memref<1x32xf32, #tpu.memory_space<vmem>>, %arg4: memref<1x1x8xf32, #tpu.memory_space<vmem>>) attributes {dimension_semantics = [#tpu.dimension_semantics<parallel>], iteration_bounds = array<i64: 1>, scalar_prefetch = 0 : i64, scratch_operands = 0 : i64, tpu.core_type = #tpu.core_type<tc>, window_params = [{transform_indices = @transform_0, window_bounds = array<i64: 8, 8, 32>}, {transform_indices = @transform_1, window_bounds = array<i64: 8, 8, 8>}, {pipeline_mode = #tpu.pipeline_mode<synchronous>, transform_indices = @transform_2, window_bounds = array<i64: 1, 32>}, {transform_indices = @transform_3, window_bounds = array<i64: 1, 1, 8>}]} {
    %c0 = arith.constant 0 : index
    %c0_0 = arith.constant 0 : index
    %c0_1 = arith.constant 0 : index
    %0 = vector.load %arg1[%c0, %c0_0, %c0_1] : memref<8x8x32xf32, #tpu.memory_space<vmem>>, vector<8x8x32xf32>
    %cst = arith.constant dense<0.000000e+00> : vector<8x8xf32>
    %1 = vector.multi_reduction <add>, %0, %cst [2] : vector<8x8x32xf32> to vector<8x8xf32>
    %2 = vector.shape_cast %1 : vector<8x8xf32> to vector<8x8x1xf32>
    %cst_2 = arith.constant 3.125000e-02 : f32
    %3 = vector.broadcast %cst_2 : f32 to vector<8x8x1xf32>
    %4 = arith.mulf %2, %3 : vector<8x8x1xf32>
    %5 = vector.broadcast %4 : vector<8x8x1xf32> to vector<8x8x32xf32>
    %6 = arith.subf %0, %5 : vector<8x8x32xf32>
    %7 = arith.mulf %6, %6 : vector<8x8x32xf32>
    %cst_3 = arith.constant dense<0.000000e+00> : vector<8x8xf32>
    %8 = vector.multi_reduction <add>, %7, %cst_3 [2] : vector<8x8x32xf32> to vector<8x8xf32>
    %9 = vector.shape_cast %8 : vector<8x8xf32> to vector<8x8x1xf32>
    %cst_4 = arith.constant 3.125000e-02 : f32
    %10 = vector.broadcast %cst_4 : f32 to vector<8x8x1xf32>
    %11 = arith.mulf %9, %10 : vector<8x8x1xf32>
    %cst_5 = arith.constant 9.99999974E-6 : f32
    %12 = vector.broadcast %cst_5 : f32 to vector<8x8x1xf32>
    %13 = arith.addf %11, %12 : vector<8x8x1xf32>
    %14 = math.rsqrt %13 : vector<8x8x1xf32>
    %c0_6 = arith.constant 0 : index
    %c0_7 = arith.constant 0 : index
    %15 = vector.load %arg3[%c0_6, %c0_7] : memref<1x32xf32, #tpu.memory_space<vmem>>, vector<1x32xf32>
    %16 = vector.shape_cast %15 : vector<1x32xf32> to vector<1x1x32xf32>
    %17 = vector.broadcast %16 : vector<1x1x32xf32> to vector<8x8x32xf32>
    %18 = arith.mulf %6, %17 : vector<8x8x32xf32>
    %cst_8 = arith.constant dense<0.000000e+00> : vector<8x8xf32>
    %19 = vector.multi_reduction <add>, %18, %cst_8 [2] : vector<8x8x32xf32> to vector<8x8xf32>
    %20 = vector.shape_cast %19 : vector<8x8xf32> to vector<8x8x1xf32>
    %21 = arith.mulf %14, %20 : vector<8x8x1xf32>
    %22 = vector.shape_cast %21 : vector<8x8x1xf32> to vector<8x8xf32>
    %c0_9 = arith.constant 0 : index
    %c0_10 = arith.constant 0 : index
    %c0_11 = arith.constant 0 : index
    %23 = vector.load %arg2[%c0_9, %c0_10, %c0_11] : memref<8x8x8xf32, #tpu.memory_space<vmem>>, vector<8x8x8xf32>
    %24 = vector.extract_strided_slice %23 {offsets = [0, 0, 0], sizes = [8, 1, 8], strides = [1, 1, 1]} : vector<8x8x8xf32> to vector<8x1x8xf32>
    %25 = vector.shape_cast %24 : vector<8x1x8xf32> to vector<8x8xf32>
    %26 = vector.extract_strided_slice %23 {offsets = [0, 1, 0], sizes = [8, 1, 8], strides = [1, 1, 1]} : vector<8x8x8xf32> to vector<8x1x8xf32>
    %27 = vector.shape_cast %26 : vector<8x1x8xf32> to vector<8x8xf32>
    %28 = vector.extract_strided_slice %23 {offsets = [0, 2, 0], sizes = [8, 1, 8], strides = [1, 1, 1]} : vector<8x8x8xf32> to vector<8x1x8xf32>
    %29 = vector.shape_cast %28 : vector<8x1x8xf32> to vector<8x8xf32>
    %30 = vector.extract_strided_slice %23 {offsets = [0, 3, 0], sizes = [8, 1, 8], strides = [1, 1, 1]} : vector<8x8x8xf32> to vector<8x1x8xf32>
    %31 = vector.shape_cast %30 : vector<8x1x8xf32> to vector<8x8xf32>
    %32 = vector.extract_strided_slice %23 {offsets = [0, 4, 0], sizes = [8, 1, 8], strides = [1, 1, 1]} : vector<8x8x8xf32> to vector<8x1x8xf32>
    %33 = vector.shape_cast %32 : vector<8x1x8xf32> to vector<8x8xf32>
    %34 = vector.extract_strided_slice %23 {offsets = [0, 5, 0], sizes = [8, 1, 8], strides = [1, 1, 1]} : vector<8x8x8xf32> to vector<8x1x8xf32>
    %35 = vector.shape_cast %34 : vector<8x1x8xf32> to vector<8x8xf32>
    %36 = arith.addf %22, %33 : vector<8x8xf32>
    %cst_12 = arith.constant 0.000000e+00 : f32
    %37 = vector.broadcast %cst_12 : f32 to vector<8x8xf32>
    %38 = arith.maximumf %36, %37 : vector<8x8xf32>
    %39 = math.absf %36 : vector<8x8xf32>
    %cst_13 = arith.constant 0.000000e+00 : f32
    %40 = vector.broadcast %cst_13 : f32 to vector<8x8xf32>
    %41 = arith.subf %40, %39 : vector<8x8xf32>
    %42 = math.exp %41 : vector<8x8xf32>
    %43 = math.log1p %42 : vector<8x8xf32>
    %44 = arith.addf %38, %43 : vector<8x8xf32>
    %45 = arith.mulf %44, %35 : vector<8x8xf32>
    %cst_14 = arith.constant dense<0.000000e+00> : vector<8xf32>
    %46 = vector.multi_reduction <add>, %31, %cst_14 [1] : vector<8x8xf32> to vector<8xf32>
    %47 = vector.shape_cast %46 : vector<8xf32> to vector<8x1xf32>
    %cst_15 = arith.constant 9.99999996E-13 : f32
    %48 = vector.broadcast %cst_15 : f32 to vector<8x1xf32>
    %49 = arith.maximumf %47, %48 : vector<8x1xf32>
    %cst_16 = arith.constant 1.000000e+00 : f32
    %50 = vector.broadcast %cst_16 : f32 to vector<8x1xf32>
    %51 = arith.divf %50, %49 : vector<8x1xf32>
    %52 = arith.mulf %31, %25 : vector<8x8xf32>
    %cst_17 = arith.constant dense<0.000000e+00> : vector<8xf32>
    %53 = vector.multi_reduction <add>, %52, %cst_17 [1] : vector<8x8xf32> to vector<8xf32>
    %54 = vector.shape_cast %53 : vector<8xf32> to vector<8x1xf32>
    %55 = arith.mulf %54, %51 : vector<8x1xf32>
    %56 = arith.mulf %31, %27 : vector<8x8xf32>
    %cst_18 = arith.constant dense<0.000000e+00> : vector<8xf32>
    %57 = vector.multi_reduction <add>, %56, %cst_18 [1] : vector<8x8xf32> to vector<8xf32>
    %58 = vector.shape_cast %57 : vector<8xf32> to vector<8x1xf32>
    %59 = arith.mulf %58, %51 : vector<8x1xf32>
    %60 = arith.mulf %31, %29 : vector<8x8xf32>
    %cst_19 = arith.constant dense<0.000000e+00> : vector<8xf32>
    %61 = vector.multi_reduction <add>, %60, %cst_19 [1] : vector<8x8xf32> to vector<8xf32>
    %62 = vector.shape_cast %61 : vector<8xf32> to vector<8x1xf32>
    %63 = arith.mulf %62, %51 : vector<8x1xf32>
    %64 = vector.broadcast %55 : vector<8x1xf32> to vector<8x8xf32>
    %65 = arith.subf %25, %64 : vector<8x8xf32>
    %66 = vector.broadcast %59 : vector<8x1xf32> to vector<8x8xf32>
    %67 = arith.subf %27, %66 : vector<8x8xf32>
    %68 = vector.broadcast %63 : vector<8x1xf32> to vector<8x8xf32>
    %69 = arith.subf %29, %68 : vector<8x8xf32>
    %70 = arith.mulf %65, %65 : vector<8x8xf32>
    %71 = arith.mulf %67, %67 : vector<8x8xf32>
    %72 = arith.addf %70, %71 : vector<8x8xf32>
    %73 = arith.mulf %69, %69 : vector<8x8xf32>
    %74 = arith.addf %72, %73 : vector<8x8xf32>
    %75 = arith.mulf %45, %74 : vector<8x8xf32>
    %cst_20 = arith.constant dense<0.000000e+00> : vector<8xf32>
    %76 = vector.multi_reduction <add>, %75, %cst_20 [1] : vector<8x8xf32> to vector<8xf32>
    %77 = vector.shape_cast %76 : vector<8xf32> to vector<1x8xf32>
    %c0_21 = arith.constant 0 : index
    %c0_22 = arith.constant 0 : index
    %c0_23 = arith.constant 0 : index
    %78 = vector.load %arg4[%c0_21, %c0_22, %c0_23] : memref<1x1x8xf32, #tpu.memory_space<vmem>>, vector<1x1x8xf32>
    %79 = vector.shape_cast %78 : vector<1x1x8xf32> to vector<1x8xf32>
    %80 = vector.shape_cast %77 : vector<1x8xf32> to vector<1x1x8xf32>
    tpu.vector_store %arg4[%c0_21, %c0_22, %c0_23], %80 {strides = array<i32>} : memref<1x1x8xf32, #tpu.memory_space<vmem>>, vector<1x1x8xf32>,
    return
  }
  func.func @transform_0(%arg0: i32) -> (i32, i32, i32) {
    %c0_i32 = arith.constant 0 : i32
    %c0_i32_0 = arith.constant 0 : i32
    %c0_i32_1 = arith.constant 0 : i32
    return %arg0, %c0_i32, %c0_i32_0 : i32, i32, i32
  }
  func.func @transform_1(%arg0: i32) -> (i32, i32, i32) {
    %c0_i32 = arith.constant 0 : i32
    %c0_i32_0 = arith.constant 0 : i32
    %c0_i32_1 = arith.constant 0 : i32
    return %arg0, %c0_i32, %c0_i32_0 : i32, i32, i32
  }
  func.func @transform_2(%arg0: i32) -> (i32, i32) {
    %c0_i32 = arith.constant 0 : i32
    %c0_i32_0 = arith.constant 0 : i32
    %c0_i32_1 = arith.constant 0 : i32
    return %c0_i32, %c0_i32_0 : i32, i32
  }
  func.func @transform_3(%arg0: i32) -> (i32, i32, i32) {
    %c0_i32 = arith.constant 0 : i32
    %c0_i32_0 = arith.constant 0 : i32
    %c0_i32_1 = arith.constant 0 : i32
    return %arg0, %c0_i32, %c0_i32_0 : i32, i32, i32
  }
}

</mosaic_0001>

<llo_original>
// kernel: tpu_custom_call.1
$region0: #{tpu_custom_call.1}
  #allocation0 [shape = 'u32[]', space=smem, size = 0x4, offset = 0x4, fixed_abs, tag = 'smem constant byte address 0x4 - core index']
  #allocation1 [shape = 'u32[144,128]{1,0:T(1,128)}', space=vmem, size = 0x12000, scoped, tag = 'internal scratch']
  %s0 = inlined_call_operand.hbm [shape: f32[8,8,32], index: 0, kind: input, shape index: {}]
  %s1 = inlined_call_operand.hbm [shape: f32[8,8,8], index: 1, kind: input, shape index: {}]
  %s2 = inlined_call_operand.vmem [shape: f32[1,32], index: 2, kind: input, shape index: {}]
  %s3 = inlined_call_operand.hbm [shape: f32[1,1,8], index: 3, kind: output, shape index: {}]
  %s4 = sld [smem:[#allocation0]]
  $region30: #{tpu_custom_call.1} parent=0
    _
  %s6 = ssub.s32 1, %s4
  %s7 = scalar_select 0, %s6, %s4
  $region1: #{tpu_custom_call.1} parent=0
    #allocation2 [shape = 'u8[32768]{0}', space=vmem, size = 0x8000, scoped, tag = 'input window, operand 0, single buffered']
    #allocation3 [shape = 's32[1]{0}', space=sflag, size = 0x4, scoped, tag = 'scoped memory for tpu_custom_call.1']
    #allocation4 [shape = 's32[1]{0}', space=sflag, size = 0x4, scoped, tag = 'scoped memory for tpu_custom_call.1']
    #allocation5 [shape = 'u8[32768]{0}', space=vmem, size = 0x8000, scoped, tag = 'input window, operand 1, single buffered']
    #allocation6 [shape = 's32[1]{0}', space=sflag, size = 0x4, scoped, tag = 'scoped memory for tpu_custom_call.1']
    #allocation7 [shape = 'u8[512]{0}', space=vmem, size = 0x400, scoped, tag = 'output window, operand 0, single buffered']
    %8 = vsyncpa [#allocation3], 0
    %9 = vsyncpa [#allocation6], 0
    %10 = vsyncpa [#allocation4], 0
    // Predicated region
    $region2: #{tpu_custom_call.1} parent=1 // pred_check
      _
    $region3: #{tpu_custom_call.1} parent=1 // pred_check_branch
      %12 = sbr.rel (0) target = $region5
    $region4: #{tpu_custom_call.1} parent=1 // pred_region
      %s14 = ssub.s32 1024, 1024
      %15 = vsyncadd [#allocation3], %s14
      %s16 = sshll.u32 [#allocation2], 4
      %s17 = int_to_ptr.vmem [resolvable:$true] %s16
      %22 = dma.hbm_to_vmem [thread:$0]  %s0, 1024, %s17, [#allocation3], 128, 128, 8
    $region5: #{tpu_custom_call.1} parent=1 // pred_fallthru
      _
    // Predicated region
    $region6: #{tpu_custom_call.1} parent=1 // pred_check
      _
    $region7: #{tpu_custom_call.1} parent=1 // pred_check_branch
      %24 = sbr.rel (0) target = $region9
    $region8: #{tpu_custom_call.1} parent=1 // pred_region
      %s26 = ssub.s32 1024, 1024
      %27 = vsyncadd [#allocation6], %s26
      %s28 = sshll.u32 [#allocation5], 4
      %s29 = int_to_ptr.vmem [resolvable:$true] %s28
      %34 = dma.hbm_to_vmem [thread:$0]  %s1, 1024, %s29, [#allocation6], 128, 128, 8
    $region9: #{tpu_custom_call.1} parent=1 // pred_fallthru
      _
    // Predicated region
    $region10: #{tpu_custom_call.1} parent=1 // pred_check
      _
    $region11: #{tpu_custom_call.1} parent=1 // pred_check_branch
      %36 = sbr.rel (0) target = $region13
    $region12: #{tpu_custom_call.1} parent=1 // pred_region
      _
    $region13: #{tpu_custom_call.1} parent=1 // pred_fallthru
      _
    // Predicated region
    $region14: #{tpu_custom_call.1} parent=1 // pred_check
      _
    $region15: #{tpu_custom_call.1} parent=1 // pred_check_branch
      %38 = sbr.rel (0) target = $region17
    $region16: #{tpu_custom_call.1} parent=1 // pred_region
      %39 = dma.done [#allocation3], 1024
    $region17: #{tpu_custom_call.1} parent=1 // pred_fallthru
      _
    // Predicated region
    $region18: #{tpu_custom_call.1} parent=1 // pred_check
      _
    $region19: #{tpu_custom_call.1} parent=1 // pred_check_branch
      %41 = sbr.rel (0) target = $region21
    $region20: #{tpu_custom_call.1} parent=1 // pred_region
      %42 = dma.done [#allocation6], 1024
    $region21: #{tpu_custom_call.1} parent=1 // pred_fallthru
      _
    %v43 = vld [vmem:[#allocation2] sm:$0xff]
    %v44 = vld [vmem:[#allocation2 + $0x8] sm:$0xff]
    %v45 = vld [vmem:[#allocation2 + $0x10] sm:$0xff]
    %v46 = vld [vmem:[#allocation2 + $0x18] sm:$0xff]
    %v47 = vld [vmem:[#allocation2 + $0x20] sm:$0xff]
    %v48 = vld [vmem:[#allocation2 + $0x28] sm:$0xff]
    %v49 = vld [vmem:[#allocation2 + $0x30] sm:$0xff]
    %v50 = vld [vmem:[#allocation2 + $0x38] sm:$0xff]
    %vm51 = vcmask 261120
    %v52 = vsel %vm51, %v43, 0.0
    %53 = vadd.xlane.f32.xlu0 %v52
    %v54 = vpop.xlane.xlu0 %53
    %v55 = vsel %vm51, %v44, 0.0
    %56 = vadd.xlane.f32.xlu0 %v55
    %v57 = vpop.xlane.xlu0 %56
    %v58 = vsel %vm51, %v45, 0.0
    %59 = vadd.xlane.f32.xlu0 %v58
    %v60 = vpop.xlane.xlu0 %59
    %v61 = vsel %vm51, %v46, 0.0
    %62 = vadd.xlane.f32.xlu0 %v61
    %v63 = vpop.xlane.xlu0 %62
    %v64 = vsel %vm51, %v47, 0.0
    %65 = vadd.xlane.f32.xlu0 %v64
    %v66 = vpop.xlane.xlu0 %65
    %v67 = vsel %vm51, %v48, 0.0
    %68 = vadd.xlane.f32.xlu0 %v67
    %v69 = vpop.xlane.xlu0 %68
    %v70 = vsel %vm51, %v49, 0.0
    %71 = vadd.xlane.f32.xlu0 %v70
    %v72 = vpop.xlane.xlu0 %71
    %v73 = vsel %vm51, %v50, 0.0
    %74 = vadd.xlane.f32.xlu0 %v73
    %v75 = vpop.xlane.xlu0 %74
    %v76 = vmul.f32 %v54, 0.03125
    %v77 = vmul.f32 %v57, 0.03125
    %v78 = vmul.f32 %v60, 0.03125
    %v79 = vmul.f32 %v63, 0.03125
    %v80 = vmul.f32 %v66, 0.03125
    %v81 = vmul.f32 %v69, 0.03125
    %v82 = vmul.f32 %v72, 0.03125
    %v83 = vmul.f32 %v75, 0.03125
    %v84 = vsub.f32 %v43, %v76
    %v85 = vsub.f32 %v44, %v77
    %v86 = vsub.f32 %v45, %v78
    %v87 = vsub.f32 %v46, %v79
    %v88 = vsub.f32 %v47, %v80
    %v89 = vsub.f32 %v48, %v81
    %v90 = vsub.f32 %v49, %v82
    %v91 = vsub.f32 %v50, %v83
    %v92 = vmul.f32 %v84, %v84
    %v93 = vmul.f32 %v85, %v85
    %v94 = vmul.f32 %v86, %v86
    %v95 = vmul.f32 %v87, %v87
    %v96 = vmul.f32 %v88, %v88
    %v97 = vmul.f32 %v89, %v89
    %v98 = vmul.f32 %v90, %v90
    %v99 = vmul.f32 %v91, %v91
    %v100 = vsel %vm51, %v92, 0.0
    %101 = vadd.xlane.f32.xlu0 %v100
    %v102 = vpop.xlane.xlu0 %101
    %v103 = vsel %vm51, %v93, 0.0
    %104 = vadd.xlane.f32.xlu0 %v103
    %v105 = vpop.xlane.xlu0 %104
    %v106 = vsel %vm51, %v94, 0.0
    %107 = vadd.xlane.f32.xlu0 %v106
    %v108 = vpop.xlane.xlu0 %107
    %v109 = vsel %vm51, %v95, 0.0
    %110 = vadd.xlane.f32.xlu0 %v109
    %v111 = vpop.xlane.xlu0 %110
    %v112 = vsel %vm51, %v96, 0.0
    %113 = vadd.xlane.f32.xlu0 %v112
    %v114 = vpop.xlane.xlu0 %113
    %v115 = vsel %vm51, %v97, 0.0
    %116 = vadd.xlane.f32.xlu0 %v115
    %v117 = vpop.xlane.xlu0 %116
    %v118 = vsel %vm51, %v98, 0.0
    %119 = vadd.xlane.f32.xlu0 %v118
    %v120 = vpop.xlane.xlu0 %119
    %v121 = vsel %vm51, %v99, 0.0
    %122 = vadd.xlane.f32.xlu0 %v121
    %v123 = vpop.xlane.xlu0 %122
    %v124 = vmul.f32 %v102, 0.03125
    %v125 = vmul.f32 %v105, 0.03125
    %v126 = vmul.f32 %v108, 0.03125
    %v127 = vmul.f32 %v111, 0.03125
    %v128 = vmul.f32 %v114, 0.03125
    %v129 = vmul.f32 %v117, 0.03125
    %v130 = vmul.f32 %v120, 0.03125
    %v131 = vmul.f32 %v123, 0.03125
    %v132 = vadd.f32 %v124, 1e-05
    %v133 = vadd.f32 %v125, 1e-05
    %v134 = vadd.f32 %v126, 1e-05
    %v135 = vadd.f32 %v127, 1e-05
    %v136 = vadd.f32 %v128, 1e-05
    %v137 = vadd.f32 %v129, 1e-05
    %v138 = vadd.f32 %v130, 1e-05
    %v139 = vadd.f32 %v131, 1e-05
    %v140 = vrsqrt.pop %v132
    %v141 = vrsqrt.pop %v133
    %v142 = vrsqrt.pop %v134
    %v143 = vrsqrt.pop %v135
    %v144 = vrsqrt.pop %v136
    %v145 = vrsqrt.pop %v137
    %v146 = vrsqrt.pop %v138
    %v147 = vrsqrt.pop %v139
    %v148 = vld [vmem:[%s2] sm:$0x1]
    %v150 = vlaneseq
    %v151 = vshrl.u32 %v150, 7
    %v152 = vsub.s32 0, %v151
    %v153 = vrot.slane %v148, %v152
    %v155 = vmul.f32 %v84, %v153
    %v156 = vmul.f32 %v85, %v153
    %v157 = vmul.f32 %v86, %v153
    %v158 = vmul.f32 %v87, %v153
    %v159 = vmul.f32 %v88, %v153
    %v160 = vmul.f32 %v89, %v153
    %v161 = vmul.f32 %v90, %v153
    %v162 = vmul.f32 %v91, %v153
    %v163 = vsel %vm51, %v155, 0.0
    %164 = vadd.xlane.f32.xlu0 %v163
    %v165 = vpop.xlane.xlu0 %164
    %v166 = vsel %vm51, %v156, 0.0
    %167 = vadd.xlane.f32.xlu0 %v166
    %v168 = vpop.xlane.xlu0 %167
    %v169 = vsel %vm51, %v157, 0.0
    %170 = vadd.xlane.f32.xlu0 %v169
    %v171 = vpop.xlane.xlu0 %170
    %v172 = vsel %vm51, %v158, 0.0
    %173 = vadd.xlane.f32.xlu0 %v172
    %v174 = vpop.xlane.xlu0 %173
    %v175 = vsel %vm51, %v159, 0.0
    %176 = vadd.xlane.f32.xlu0 %v175
    %v177 = vpop.xlane.xlu0 %176
    %v178 = vsel %vm51, %v160, 0.0
    %179 = vadd.xlane.f32.xlu0 %v178
    %v180 = vpop.xlane.xlu0 %179
    %v181 = vsel %vm51, %v161, 0.0
    %182 = vadd.xlane.f32.xlu0 %v181
    %v183 = vpop.xlane.xlu0 %182
    %v184 = vsel %vm51, %v162, 0.0
    %185 = vadd.xlane.f32.xlu0 %v184
    %v186 = vpop.xlane.xlu0 %185
    %v187 = vmul.f32 %v140, %v165
    %v188 = vmul.f32 %v141, %v168
    %v189 = vmul.f32 %v142, %v171
    %v190 = vmul.f32 %v143, %v174
    %v191 = vmul.f32 %v144, %v177
    %v192 = vmul.f32 %v145, %v180
    %v193 = vmul.f32 %v146, %v183
    %v194 = vmul.f32 %v147, %v186
    %v195 = vld [vmem:[#allocation5] sm:$0xff]
    %v196 = vld [vmem:[#allocation5 + $0x8] sm:$0xff]
    %v197 = vld [vmem:[#allocation5 + $0x10] sm:$0xff]
    %v198 = vld [vmem:[#allocation5 + $0x18] sm:$0xff]
    %v199 = vld [vmem:[#allocation5 + $0x20] sm:$0xff]
    %v200 = vld [vmem:[#allocation5 + $0x28] sm:$0xff]
    %v201 = vld [vmem:[#allocation5 + $0x30] sm:$0xff]
    %v202 = vld [vmem:[#allocation5 + $0x38] sm:$0xff]
    %v211 = vlaneseq
    %v212 = vshrl.u32 %v211, 7
    %v213 = vsub.s32 4, %v212
    %v214 = vrot.slane %v195, %v213
    %216 = vbcast.lane.b32.xlu0 %v214, 256
    %v217 = vpop.permute.xlu0 %216
    %v218 = vlaneseq
    %v219 = vshrl.u32 %v218, 7
    %v220 = vsub.s32 4, %v219
    %v221 = vrot.slane %v196, %v220
    %223 = vbcast.lane.b32.xlu0 %v221, 256
    %v224 = vpop.permute.xlu0 %223
    %v225 = vlaneseq
    %v226 = vshrl.u32 %v225, 7
    %v227 = vsub.s32 4, %v226
    %v228 = vrot.slane %v197, %v227
    %230 = vbcast.lane.b32.xlu0 %v228, 256
    %v231 = vpop.permute.xlu0 %230
    %v232 = vlaneseq
    %v233 = vshrl.u32 %v232, 7
    %v234 = vsub.s32 4, %v233
    %v235 = vrot.slane %v198, %v234
    %237 = vbcast.lane.b32.xlu0 %v235, 256
    %v238 = vpop.permute.xlu0 %237
    %v239 = vlaneseq
    %v240 = vshrl.u32 %v239, 7
    %v241 = vsub.s32 4, %v240
    %v242 = vrot.slane %v199, %v241
    %244 = vbcast.lane.b32.xlu0 %v242, 256
    %v245 = vpop.permute.xlu0 %244
    %v246 = vlaneseq
    %v247 = vshrl.u32 %v246, 7
    %v248 = vsub.s32 4, %v247
    %v249 = vrot.slane %v200, %v248
    %251 = vbcast.lane.b32.xlu0 %v249, 256
    %v252 = vpop.permute.xlu0 %251
    %v253 = vlaneseq
    %v254 = vshrl.u32 %v253, 7
    %v255 = vsub.s32 4, %v254
    %v256 = vrot.slane %v201, %v255
    %258 = vbcast.lane.b32.xlu0 %v256, 256
    %v259 = vpop.permute.xlu0 %258
    %v260 = vlaneseq
    %v261 = vshrl.u32 %v260, 7
    %v262 = vsub.s32 4, %v261
    %v263 = vrot.slane %v202, %v262
    %265 = vbcast.lane.b32.xlu0 %v263, 256
    %v266 = vpop.permute.xlu0 %265
    %v275 = vadd.f32 %v187, %v217
    %v276 = vadd.f32 %v188, %v224
    %v277 = vadd.f32 %v189, %v231
    %v278 = vadd.f32 %v190, %v238
    %v279 = vadd.f32 %v191, %v245
    %v280 = vadd.f32 %v192, %v252
    %v281 = vadd.f32 %v193, %v259
    %v282 = vadd.f32 %v194, %v266
    %v283 = vmax.f32 %v275, 0.0
    %v284 = vmax.f32 %v276, 0.0
    %v285 = vmax.f32 %v277, 0.0
    %v286 = vmax.f32 %v278, 0.0
    %v287 = vmax.f32 %v279, 0.0
    %v288 = vmax.f32 %v280, 0.0
    %v289 = vmax.f32 %v281, 0.0
    %v290 = vmax.f32 %v282, 0.0
    %v291 = vand.u32 2147483647, %v275
    %v292 = vand.u32 2147483647, %v276
    %v293 = vand.u32 2147483647, %v277
    %v294 = vand.u32 2147483647, %v278
    %v295 = vand.u32 2147483647, %v279
    %v296 = vand.u32 2147483647, %v280
    %v297 = vand.u32 2147483647, %v281
    %v298 = vand.u32 2147483647, %v282
    %v299 = vsub.f32 0.0, %v291
    %v300 = vsub.f32 0.0, %v292
    %v301 = vsub.f32 0.0, %v293
    %v302 = vsub.f32 0.0, %v294
    %v303 = vsub.f32 0.0, %v295
    %v304 = vsub.f32 0.0, %v296
    %v305 = vsub.f32 0.0, %v297
    %v306 = vsub.f32 0.0, %v298
    %v307 = vmul.f32 %v299, 1.442695
    %v308 = vpow.pop %v307
    %v309 = vmul.f32 %v300, 1.442695
    %v310 = vpow.pop %v309
    %v311 = vmul.f32 %v301, 1.442695
    %v312 = vpow.pop %v311
    %v313 = vmul.f32 %v302, 1.442695
    %v314 = vpow.pop %v313
    %v315 = vmul.f32 %v303, 1.442695
    %v316 = vpow.pop %v315
    %v317 = vmul.f32 %v304, 1.442695
    %v318 = vpow.pop %v317
    %v319 = vmul.f32 %v305, 1.442695
    %v320 = vpow.pop %v319
    %v321 = vmul.f32 %v306, 1.442695
    %v322 = vpow.pop %v321
    %v323 = vadd.f32 %v308, 1.0
    %v324 = vlog2.pop %v323
    %v325 = vmul.f32 %v324, 0.6931472
    %v326 = vmul.f32 -0.5, %v308
    %v327 = vadd.f32 %v326, 1.0
    %v328 = vmul.f32 %v327, %v308
    %v329 = vand.u32 2147483647, %v308
    %vm330 = vcmp.lt.f32.partialorder %v329, 0.0004427343
    %v331 = vsel %vm330, %v328, %v325
    %v332 = vadd.f32 %v310, 1.0
    %v333 = vlog2.pop %v332
    %v334 = vmul.f32 %v333, 0.6931472
    %v335 = vmul.f32 -0.5, %v310
    %v336 = vadd.f32 %v335, 1.0
    %v337 = vmul.f32 %v336, %v310
    %v338 = vand.u32 2147483647, %v310
    %vm339 = vcmp.lt.f32.partialorder %v338, 0.0004427343
    %v340 = vsel %vm339, %v337, %v334
    %v341 = vadd.f32 %v312, 1.0
    %v342 = vlog2.pop %v341
    %v343 = vmul.f32 %v342, 0.6931472
    %v344 = vmul.f32 -0.5, %v312
    %v345 = vadd.f32 %v344, 1.0
    %v346 = vmul.f32 %v345, %v312
    %v347 = vand.u32 2147483647, %v312
    %vm348 = vcmp.lt.f32.partialorder %v347, 0.0004427343
    %v349 = vsel %vm348, %v346, %v343
    %v350 = vadd.f32 %v314, 1.0
    %v351 = vlog2.pop %v350
    %v352 = vmul.f32 %v351, 0.6931472
    %v353 = vmul.f32 -0.5, %v314
    %v354 = vadd.f32 %v353, 1.0
    %v355 = vmul.f32 %v354, %v314
    %v356 = vand.u32 2147483647, %v314
    %vm357 = vcmp.lt.f32.partialorder %v356, 0.0004427343
    %v358 = vsel %vm357, %v355, %v352
    %v359 = vadd.f32 %v316, 1.0
    %v360 = vlog2.pop %v359
    %v361 = vmul.f32 %v360, 0.6931472
    %v362 = vmul.f32 -0.5, %v316
    %v363 = vadd.f32 %v362, 1.0
    %v364 = vmul.f32 %v363, %v316
    %v365 = vand.u32 2147483647, %v316
    %vm366 = vcmp.lt.f32.partialorder %v365, 0.0004427343
    %v367 = vsel %vm366, %v364, %v361
    %v368 = vadd.f32 %v318, 1.0
    %v369 = vlog2.pop %v368
    %v370 = vmul.f32 %v369, 0.6931472
    %v371 = vmul.f32 -0.5, %v318
    %v372 = vadd.f32 %v371, 1.0
    %v373 = vmul.f32 %v372, %v318
    %v374 = vand.u32 2147483647, %v318
    %vm375 = vcmp.lt.f32.partialorder %v374, 0.0004427343
    %v376 = vsel %vm375, %v373, %v370
    %v377 = vadd.f32 %v320, 1.0
    %v378 = vlog2.pop %v377
    %v379 = vmul.f32 %v378, 0.6931472
    %v380 = vmul.f32 -0.5, %v320
    %v381 = vadd.f32 %v380, 1.0
    %v382 = vmul.f32 %v381, %v320
    %v383 = vand.u32 2147483647, %v320
    %vm384 = vcmp.lt.f32.partialorder %v383, 0.0004427343
    %v385 = vsel %vm384, %v382, %v379
    %v386 = vadd.f32 %v322, 1.0
    %v387 = vlog2.pop %v386
    %v388 = vmul.f32 %v387, 0.6931472
    %v389 = vmul.f32 -0.5, %v322
    %v390 = vadd.f32 %v389, 1.0
    %v391 = vmul.f32 %v390, %v322
    %v392 = vand.u32 2147483647, %v322
    %vm393 = vcmp.lt.f32.partialorder %v392, 0.0004427343
    %v394 = vsel %vm393, %v391, %v388
    %v395 = vadd.f32 %v283, %v331
    %v396 = vadd.f32 %v284, %v340
    %v397 = vadd.f32 %v285, %v349
    %v398 = vadd.f32 %v286, %v358
    %v399 = vadd.f32 %v287, %v367
    %v400 = vadd.f32 %v288, %v376
    %v401 = vadd.f32 %v289, %v385
    %v402 = vadd.f32 %v290, %v394
    %v403 = vlaneseq
    %v404 = vshrl.u32 %v403, 7
    %v405 = vsub.s32 5, %v404
    %v406 = vrot.slane %v195, %v405
    %408 = vbcast.lane.b32.xlu0 %v406, 256
    %v409 = vpop.permute.xlu0 %408
    %v410 = vlaneseq
    %v411 = vshrl.u32 %v410, 7
    %v412 = vsub.s32 5, %v411
    %v413 = vrot.slane %v196, %v412
    %415 = vbcast.lane.b32.xlu0 %v413, 256
    %v416 = vpop.permute.xlu0 %415
    %v417 = vlaneseq
    %v418 = vshrl.u32 %v417, 7
    %v419 = vsub.s32 5, %v418
    %v420 = vrot.slane %v197, %v419
    %422 = vbcast.lane.b32.xlu0 %v420, 256
    %v423 = vpop.permute.xlu0 %422
    %v424 = vlaneseq
    %v425 = vshrl.u32 %v424, 7
    %v426 = vsub.s32 5, %v425
    %v427 = vrot.slane %v198, %v426
    %429 = vbcast.lane.b32.xlu0 %v427, 256
    %v430 = vpop.permute.xlu0 %429
    %v431 = vlaneseq
    %v432 = vshrl.u32 %v431, 7
    %v433 = vsub.s32 5, %v432
    %v434 = vrot.slane %v199, %v433
    %436 = vbcast.lane.b32.xlu0 %v434, 256
    %v437 = vpop.permute.xlu0 %436
    %v438 = vlaneseq
    %v439 = vshrl.u32 %v438, 7
    %v440 = vsub.s32 5, %v439
    %v441 = vrot.slane %v200, %v440
    %443 = vbcast.lane.b32.xlu0 %v441, 256
    %v444 = vpop.permute.xlu0 %443
    %v445 = vlaneseq
    %v446 = vshrl.u32 %v445, 7
    %v447 = vsub.s32 5, %v446
    %v448 = vrot.slane %v201, %v447
    %450 = vbcast.lane.b32.xlu0 %v448, 256
    %v451 = vpop.permute.xlu0 %450
    %v452 = vlaneseq
    %v453 = vshrl.u32 %v452, 7
    %v454 = vsub.s32 5, %v453
    %v455 = vrot.slane %v202, %v454
    %457 = vbcast.lane.b32.xlu0 %v455, 256
    %v458 = vpop.permute.xlu0 %457
    %v467 = vmul.f32 %v395, %v409
    %v468 = vmul.f32 %v396, %v416
    %v469 = vmul.f32 %v397, %v423
    %v470 = vmul.f32 %v398, %v430
    %v471 = vmul.f32 %v399, %v437
    %v472 = vmul.f32 %v400, %v444
    %v473 = vmul.f32 %v401, %v451
    %v474 = vmul.f32 %v402, %v458
    %v475 = vrot.slane %v196, 7
    %vm476 = vcmask 1044484
    %v477 = vsel %vm476, %v475, %v195
    %v478 = vrot.slane %v197, 6
    %vm479 = vcmask 1045509
    %v480 = vsel %vm479, %v478, %v477
    %v481 = vrot.slane %v198, 5
    %vm482 = vcmask 1046534
    %v483 = vsel %vm482, %v481, %v480
    %v484 = vrot.slane %v199, 4
    %vm485 = vcmask 1047559
    %v486 = vsel %vm485, %v484, %v483
    %v487 = vrot.slane %v200, 3
    %v488 = vrot.slane %v201, 2
    %vm489 = vcmask 1041409
    %v490 = vsel %vm489, %v488, %v487
    %v491 = vrot.slane %v202, 1
    %vm492 = vcmask 1042434
    %v493 = vsel %vm492, %v491, %v490
    %vm496 = vcmask 64515
    %v497 = vsel %vm496, %v486, 0.0
    %498 = vadd.xlane.f32.xlu0 %v497
    %v499 = vpop.xlane.xlu0 %498
    %vm500 = vcmask 59392
    %v501 = vsel %vm500, %v493, 0.0
    %502 = vadd.xlane.f32.xlu0 %v501
    %v503 = vpop.xlane.xlu0 %502
    %v504 = vmax.f32 %v499, 1e-12
    %v505 = vmax.f32 %v503, 1e-12
    %v506 = vrcp.pop %v504
    %v507 = vmul.f32 1.0, %v506
    %v508 = vrcp.pop %v505
    %v509 = vmul.f32 1.0, %v508
    %v510 = vrot.slane %v195, 5
    %v511 = vrot.slane %v196, 5
    %v512 = vrot.slane %v197, 5
    %v513 = vrot.slane %v199, 5
    %v514 = vrot.slane %v200, 5
    %v515 = vrot.slane %v201, 5
    %v516 = vrot.slane %v202, 5
    %v525 = vmul.f32 %v195, %v510
    %v526 = vmul.f32 %v196, %v511
    %v527 = vmul.f32 %v197, %v512
    %v528 = vmul.f32 %v198, %v481
    %v529 = vmul.f32 %v199, %v513
    %v530 = vmul.f32 %v200, %v514
    %v531 = vmul.f32 %v201, %v515
    %v532 = vmul.f32 %v202, %v516
    %v541 = vrot.slane %v526, 7
    %v542 = vsel %vm476, %v541, %v525
    %v543 = vrot.slane %v527, 6
    %v544 = vsel %vm479, %v543, %v542
    %v545 = vrot.slane %v528, 5
    %v546 = vsel %vm482, %v545, %v544
    %v547 = vrot.slane %v529, 4
    %v548 = vsel %vm485, %v547, %v546
    %v549 = vrot.slane %v530, 3
    %v550 = vrot.slane %v531, 2
    %v551 = vsel %vm489, %v550, %v549
    %v552 = vrot.slane %v532, 1
    %v553 = vsel %vm492, %v552, %v551
    %v556 = vsel %vm496, %v548, 0.0
    %557 = vadd.xlane.f32.xlu0 %v556
    %v558 = vpop.xlane.xlu0 %557
    %v559 = vsel %vm500, %v553, 0.0
    %560 = vadd.xlane.f32.xlu0 %v559
    %v561 = vpop.xlane.xlu0 %560
    %v562 = vmul.f32 %v558, %v507
    %v563 = vmul.f32 %v561, %v509
    %v564 = vrot.slane %v195, 6
    %v565 = vrot.slane %v196, 6
    %v566 = vrot.slane %v198, 6
    %v567 = vrot.slane %v199, 6
    %v568 = vrot.slane %v200, 6
    %v569 = vrot.slane %v201, 6
    %v570 = vrot.slane %v202, 6
    %v579 = vmul.f32 %v195, %v564
    %v580 = vmul.f32 %v196, %v565
    %v581 = vmul.f32 %v197, %v478
    %v582 = vmul.f32 %v198, %v566
    %v583 = vmul.f32 %v199, %v567
    %v584 = vmul.f32 %v200, %v568
    %v585 = vmul.f32 %v201, %v569
    %v586 = vmul.f32 %v202, %v570
    %v595 = vrot.slane %v580, 7
    %v596 = vsel %vm476, %v595, %v579
    %v597 = vrot.slane %v581, 6
    %v598 = vsel %vm479, %v597, %v596
    %v599 = vrot.slane %v582, 5
    %v600 = vsel %vm482, %v599, %v598
    %v601 = vrot.slane %v583, 4
    %v602 = vsel %vm485, %v601, %v600
    %v603 = vrot.slane %v584, 3
    %v604 = vrot.slane %v585, 2
    %v605 = vsel %vm489, %v604, %v603
    %v606 = vrot.slane %v586, 1
    %v607 = vsel %vm492, %v606, %v605
    %v610 = vsel %vm496, %v602, 0.0
    %611 = vadd.xlane.f32.xlu0 %v610
    %v612 = vpop.xlane.xlu0 %611
    %v613 = vsel %vm500, %v607, 0.0
    %614 = vadd.xlane.f32.xlu0 %v613
    %v615 = vpop.xlane.xlu0 %614
    %v616 = vmul.f32 %v612, %v507
    %v617 = vmul.f32 %v615, %v509
    %v618 = vrot.slane %v195, 7
    %v619 = vrot.slane %v197, 7
    %v620 = vrot.slane %v198, 7
    %v621 = vrot.slane %v199, 7
    %v622 = vrot.slane %v200, 7
    %v623 = vrot.slane %v201, 7
    %v624 = vrot.slane %v202, 7
    %v633 = vmul.f32 %v195, %v618
    %v634 = vmul.f32 %v196, %v475
    %v635 = vmul.f32 %v197, %v619
    %v636 = vmul.f32 %v198, %v620
    %v637 = vmul.f32 %v199, %v621
    %v638 = vmul.f32 %v200, %v622
    %v639 = vmul.f32 %v201, %v623
    %v640 = vmul.f32 %v202, %v624
    %v649 = vrot.slane %v634, 7
    %v650 = vsel %vm476, %v649, %v633
    %v651 = vrot.slane %v635, 6
    %v652 = vsel %vm479, %v651, %v650
    %v653 = vrot.slane %v636, 5
    %v654 = vsel %vm482, %v653, %v652
    %v655 = vrot.slane %v637, 4
    %v656 = vsel %vm485, %v655, %v654
    %v657 = vrot.slane %v638, 3
    %v658 = vrot.slane %v639, 2
    %v659 = vsel %vm489, %v658, %v657
    %v660 = vrot.slane %v640, 1
    %v661 = vsel %vm492, %v660, %v659
    %v664 = vsel %vm496, %v656, 0.0
    %665 = vadd.xlane.f32.xlu0 %v664
    %v666 = vpop.xlane.xlu0 %665
    %v667 = vsel %vm500, %v661, 0.0
    %668 = vadd.xlane.f32.xlu0 %v667
    %v669 = vpop.xlane.xlu0 %668
    %v670 = vmul.f32 %v666, %v507
    %v671 = vmul.f32 %v669, %v509
    %v674 = vrot.slane %v562, 3
    %v675 = vrot.slane %v562, 4
    %v676 = vrot.slane %v562, 5
    %v677 = vrot.slane %v562, 6
    %v678 = vrot.slane %v562, 7
    %v679 = vrot.slane %v563, 1
    %v680 = vrot.slane %v563, 2
    %v689 = vsub.f32 %v195, %v674
    %v690 = vsub.f32 %v196, %v675
    %v691 = vsub.f32 %v197, %v676
    %v692 = vsub.f32 %v198, %v677
    %v693 = vsub.f32 %v199, %v678
    %v694 = vsub.f32 %v200, %v563
    %v695 = vsub.f32 %v201, %v679
    %v696 = vsub.f32 %v202, %v680
    %v699 = vrot.slane %v616, 2
    %v700 = vrot.slane %v616, 3
    %v701 = vrot.slane %v616, 4
    %v702 = vrot.slane %v616, 5
    %v703 = vrot.slane %v616, 6
    %v704 = vrot.slane %v617, 7
    %v705 = vrot.slane %v617, 1
    %v714 = vsub.f32 %v195, %v699
    %v715 = vsub.f32 %v196, %v700
    %v716 = vsub.f32 %v197, %v701
    %v717 = vsub.f32 %v198, %v702
    %v718 = vsub.f32 %v199, %v703
    %v719 = vsub.f32 %v200, %v704
    %v720 = vsub.f32 %v201, %v617
    %v721 = vsub.f32 %v202, %v705
    %v724 = vrot.slane %v670, 1
    %v725 = vrot.slane %v670, 2
    %v726 = vrot.slane %v670, 3
    %v727 = vrot.slane %v670, 4
    %v728 = vrot.slane %v670, 5
    %v729 = vrot.slane %v671, 6
    %v730 = vrot.slane %v671, 7
    %v739 = vsub.f32 %v195, %v724
    %v740 = vsub.f32 %v196, %v725
    %v741 = vsub.f32 %v197, %v726
    %v742 = vsub.f32 %v198, %v727
    %v743 = vsub.f32 %v199, %v728
    %v744 = vsub.f32 %v200, %v729
    %v745 = vsub.f32 %v201, %v730
    %v746 = vsub.f32 %v202, %v671
    %v747 = vmul.f32 %v689, %v689
    %v748 = vmul.f32 %v690, %v690
    %v749 = vmul.f32 %v691, %v691
    %v750 = vmul.f32 %v692, %v692
    %v751 = vmul.f32 %v693, %v693
    %v752 = vmul.f32 %v694, %v694
    %v753 = vmul.f32 %v695, %v695
    %v754 = vmul.f32 %v696, %v696
    %v755 = vmul.f32 %v714, %v714
    %v756 = vmul.f32 %v715, %v715
    %v757 = vmul.f32 %v716, %v716
    %v758 = vmul.f32 %v717, %v717
    %v759 = vmul.f32 %v718, %v718
    %v760 = vmul.f32 %v719, %v719
    %v761 = vmul.f32 %v720, %v720
    %v762 = vmul.f32 %v721, %v721
    %v771 = vrot.slane %v755, 1
    %v772 = vrot.slane %v756, 1
    %v773 = vrot.slane %v757, 1
    %v774 = vrot.slane %v758, 1
    %v775 = vrot.slane %v759, 1
    %v776 = vrot.slane %v760, 1
    %v777 = vrot.slane %v761, 1
    %v778 = vrot.slane %v762, 1
    %v787 = vadd.f32 %v747, %v771
    %v788 = vadd.f32 %v748, %v772
    %v789 = vadd.f32 %v749, %v773
    %v790 = vadd.f32 %v750, %v774
    %v791 = vadd.f32 %v751, %v775
    %v792 = vadd.f32 %v752, %v776
    %v793 = vadd.f32 %v753, %v777
    %v794 = vadd.f32 %v754, %v778
    %v795 = vmul.f32 %v739, %v739
    %v796 = vmul.f32 %v740, %v740
    %v797 = vmul.f32 %v741, %v741
    %v798 = vmul.f32 %v742, %v742
    %v799 = vmul.f32 %v743, %v743
    %v800 = vmul.f32 %v744, %v744
    %v801 = vmul.f32 %v745, %v745
    %v802 = vmul.f32 %v746, %v746
    %v811 = vrot.slane %v795, 2
    %v812 = vrot.slane %v796, 2
    %v813 = vrot.slane %v797, 2
    %v814 = vrot.slane %v798, 2
    %v815 = vrot.slane %v799, 2
    %v816 = vrot.slane %v800, 2
    %v817 = vrot.slane %v801, 2
    %v818 = vrot.slane %v802, 2
    %v827 = vadd.f32 %v787, %v811
    %v828 = vadd.f32 %v788, %v812
    %v829 = vadd.f32 %v789, %v813
    %v830 = vadd.f32 %v790, %v814
    %v831 = vadd.f32 %v791, %v815
    %v832 = vadd.f32 %v792, %v816
    %v833 = vadd.f32 %v793, %v817
    %v834 = vadd.f32 %v794, %v818
    %v843 = vlaneseq
    %v844 = vshrl.u32 %v843, 7
    %v845 = vsub.s32 0, %v844
    %v846 = vrot.slane %v827, %v845
    %848 = vbcast.lane.b32.xlu0 %v846, 256
    %v849 = vpop.permute.xlu0 %848
    %v850 = vlaneseq
    %v851 = vshrl.u32 %v850, 7
    %v852 = vsub.s32 0, %v851
    %v853 = vrot.slane %v828, %v852
    %855 = vbcast.lane.b32.xlu0 %v853, 256
    %v856 = vpop.permute.xlu0 %855
    %v857 = vlaneseq
    %v858 = vshrl.u32 %v857, 7
    %v859 = vsub.s32 0, %v858
    %v860 = vrot.slane %v829, %v859
    %862 = vbcast.lane.b32.xlu0 %v860, 256
    %v863 = vpop.permute.xlu0 %862
    %v864 = vlaneseq
    %v865 = vshrl.u32 %v864, 7
    %v866 = vsub.s32 0, %v865
    %v867 = vrot.slane %v830, %v866
    %869 = vbcast.lane.b32.xlu0 %v867, 256
    %v870 = vpop.permute.xlu0 %869
    %v871 = vlaneseq
    %v872 = vshrl.u32 %v871, 7
    %v873 = vsub.s32 0, %v872
    %v874 = vrot.slane %v831, %v873
    %876 = vbcast.lane.b32.xlu0 %v874, 256
    %v877 = vpop.permute.xlu0 %876
    %v878 = vlaneseq
    %v879 = vshrl.u32 %v878, 7
    %v880 = vsub.s32 0, %v879
    %v881 = vrot.slane %v832, %v880
    %883 = vbcast.lane.b32.xlu0 %v881, 256
    %v884 = vpop.permute.xlu0 %883
    %v885 = vlaneseq
    %v886 = vshrl.u32 %v885, 7
    %v887 = vsub.s32 0, %v886
    %v888 = vrot.slane %v833, %v887
    %890 = vbcast.lane.b32.xlu0 %v888, 256
    %v891 = vpop.permute.xlu0 %890
    %v892 = vlaneseq
    %v893 = vshrl.u32 %v892, 7
    %v894 = vsub.s32 0, %v893
    %v895 = vrot.slane %v834, %v894
    %897 = vbcast.lane.b32.xlu0 %v895, 256
    %v898 = vpop.permute.xlu0 %897
    %v907 = vmul.f32 %v467, %v849
    %v908 = vmul.f32 %v468, %v856
    %v909 = vmul.f32 %v469, %v863
    %v910 = vmul.f32 %v470, %v870
    %v911 = vmul.f32 %v471, %v877
    %v912 = vmul.f32 %v472, %v884
    %v913 = vmul.f32 %v473, %v891
    %v914 = vmul.f32 %v474, %v898
    %923 = vset.pattern.permute.xlu0 0
    %924 = vperm.xlu0 %923, %v907
    %v925 = vpop.permute.xlu0 %924
    %926 = vset.pattern.permute.xlu0 0
    %927 = vperm.xlu0 %926, %v908
    %v928 = vpop.permute.xlu0 %927
    %929 = vset.pattern.permute.xlu0 0
    %930 = vperm.xlu0 %929, %v909
    %v931 = vpop.permute.xlu0 %930
    %932 = vset.pattern.permute.xlu0 0
    %933 = vperm.xlu0 %932, %v910
    %v934 = vpop.permute.xlu0 %933
    %935 = vset.pattern.permute.xlu0 0
    %936 = vperm.xlu0 %935, %v911
    %v937 = vpop.permute.xlu0 %936
    %938 = vset.pattern.permute.xlu0 0
    %939 = vperm.xlu0 %938, %v912
    %v940 = vpop.permute.xlu0 %939
    %941 = vset.pattern.permute.xlu0 0
    %942 = vperm.xlu0 %941, %v913
    %v943 = vpop.permute.xlu0 %942
    %944 = vset.pattern.permute.xlu0 0
    %945 = vperm.xlu0 %944, %v914
    %v946 = vpop.permute.xlu0 %945
    %v947 = vlaneseq
    %v948 = vand.u32 %v947, 127
    %v949 = vlaneseq
    %v950 = vshrl.u32 %v949, 7
    %v951 = vsub.s32 %v948, %v950
    %v952 = vrot.slane %v925, %v951
    %v953 = vlaneseq
    %v954 = vshrl.u32 %v953, 7
    %v955 = vsub.s32 %v948, %v954
    %v956 = vrot.slane %v928, %v955
    %v957 = vlaneseq
    %v958 = vshrl.u32 %v957, 7
    %v959 = vsub.s32 %v948, %v958
    %v960 = vrot.slane %v931, %v959
    %v961 = vlaneseq
    %v962 = vshrl.u32 %v961, 7
    %v963 = vsub.s32 %v948, %v962
    %v964 = vrot.slane %v934, %v963
    %v965 = vlaneseq
    %v966 = vshrl.u32 %v965, 7
    %v967 = vsub.s32 %v948, %v966
    %v968 = vrot.slane %v937, %v967
    %v969 = vlaneseq
    %v970 = vshrl.u32 %v969, 7
    %v971 = vsub.s32 %v948, %v970
    %v972 = vrot.slane %v940, %v971
    %v973 = vlaneseq
    %v974 = vshrl.u32 %v973, 7
    %v975 = vsub.s32 %v948, %v974
    %v976 = vrot.slane %v943, %v975
    %v977 = vlaneseq
    %v978 = vshrl.u32 %v977, 7
    %v979 = vsub.s32 %v948, %v978
    %v980 = vrot.slane %v946, %v979
    %v981 = vsel %vm489, %v956, %v952
    %v982 = vsel %vm492, %v960, %v981
    %vm983 = vcmask 1043459
    %v984 = vsel %vm983, %v964, %v982
    %v985 = vsel %vm476, %v968, %v984
    %v986 = vsel %vm479, %v972, %v985
    %v987 = vsel %vm482, %v976, %v986
    %v988 = vsel %vm485, %v980, %v987
    %vm990 = vcmask 64512
    %v991 = vsel %vm990, %v988, 0.0
    %992 = vadd.xlane.f32.xlu0 %v991
    %v993 = vpop.xlane.xlu0 %992
    %v995 = vlaneseq
    %v996 = vshrl.u32 %v995, 7
    %v997 = vsub.s32 %v948, %v996
    %v998 = vrot.slane %v993, %v997
    %vm1000 = vcmask 57344
    %1001 = vst.msk [vmem:[#allocation7] sm:$0x1] %vm1000, %v998
    // Predicated region
    $region22: #{tpu_custom_call.1} parent=1 // pred_check
      _
    $region23: #{tpu_custom_call.1} parent=1 // pred_check_branch
      %1003 = sbr.rel (0) target = $region25
    $region24: #{tpu_custom_call.1} parent=1 // pred_region
      %s1005 = ssub.s32 16, 16
      %1006 = vsyncadd [#allocation4], %s1005
      %s1008 = sshll.u32 [#allocation7], 4
      %s1009 = int_to_ptr.vmem [resolvable:$true] %s1008
      %1011 = dma.vmem_to_hbm [thread:$0]  %s1009, 16, %s3, [#allocation4]
    $region25: #{tpu_custom_call.1} parent=1 // pred_fallthru
      _
    // Predicated region
    $region26: #{tpu_custom_call.1} parent=1 // pred_check
      _
    $region27: #{tpu_custom_call.1} parent=1 // pred_check_branch
      %1013 = sbr.rel (0) target = $region29
    $region28: #{tpu_custom_call.1} parent=1 // pred_region
      %1014 = dma.done [#allocation4], 16
    $region29: #{tpu_custom_call.1} parent=1 // pred_fallthru
      _
    %1015 = vsyncpa [#allocation3], 1
    %1016 = vsyncpa [#allocation6], 1
    %1017 = vsyncpa [#allocation4], 1

</llo_original>
